<compile_context>
chip_gen: v7x
topology: tpu7x:2x2x1
jax: 0.10.0
libtpu: 0.0.40
codegen_flags: <defaults>
</compile_context>

<pallas_src>
import functools
import math

import jax
import jax.numpy as jnp
import numpy as np
from jax.experimental import pallas as pl
from jax.experimental.pallas import tpu as pltpu


# ----------------------------------------------------------------------------
# Tiling helper
# ----------------------------------------------------------------------------
def _tile(dim, preferred, align):
    """Largest multiple of `align` that divides `dim` and is <= `preferred`, else full `dim`.

    Returning the full dim is always legal ("block == full array dim" rule); tiles that divide
    the dim exactly avoid garbage in partial edge blocks on the contraction / kv axes.
    """
    if dim <= preferred:
        return dim
    t = (preferred // align) * align
    while t >= align:
        if dim % t == 0:
            return t
        t -= align
    return dim


_VMEM_LIMIT = 32 * 1024 * 1024  # explicit: v5e scoped default is 16 MiB; 32 MiB is safe on all gens

_MATMUL_COMPILER_PARAMS = pltpu.CompilerParams(
    dimension_semantics=("parallel", "parallel", "arbitrary"),
    vmem_limit_bytes=_VMEM_LIMIT,
)


# ----------------------------------------------------------------------------
# Kernel 1: stacked tiled linear  y[g] = x @ W[g] + b[g]   (G = 1, 2 or 3)
# ----------------------------------------------------------------------------
def _stacked_linear_kernel(x_ref, w_ref, b_ref, o_ref, *scratch, num_mats, direct_acc):
    # grid = (N/tm, Dout/tn, Din/tk); axis 2 is the contraction.
    acc_ref = o_ref if direct_acc else scratch[0]

    @pl.when(pl.program_id(2) == 0)
    def _init():
        if direct_acc:
            # f32 output: accumulate straight into the resident output block (no scratch copy).
            acc_ref[...] = jnp.broadcast_to(b_ref[...], acc_ref.shape)
        else:
            acc_ref[...] = jnp.zeros_like(acc_ref)

    x = x_ref[...]                       # x tile is read from HBM once per (i, k) step and
    for g in range(num_mats):            # reused by every stacked weight (q/k/v share it).
        acc_ref[g] += jnp.dot(x, w_ref[g], preferred_element_type=jnp.float32)

    if not direct_acc:
        @pl.when(pl.program_id(2) == pl.num_programs(2) - 1)
        def _finalize():
            o_ref[...] = (acc_ref[...] + b_ref[...].astype(jnp.float32)).astype(o_ref.dtype)


def linear_stacked(x2d, w, b, *, tm=512, tn=512, tk=512):
    """x2d: (N, Din), w: (G, Din, Dout), b: (G, 1, Dout) -> (G, N, Dout), tiled & pipelined."""
    N, Din = x2d.shape
    G, _, Dout = w.shape
    tm = _tile(N, tm, 16)       # 16-sublane alignment keeps bf16 tiles legal too
    tn = _tile(Dout, tn, 128)
    tk = _tile(Din, tk, 128)
    grid = (N // tm, Dout // tn, Din // tk)
    direct_acc = x2d.dtype == jnp.float32
    kernel = functools.partial(_stacked_linear_kernel, num_mats=G, direct_acc=direct_acc)
    scratch = [] if direct_acc else [pltpu.VMEM((G, tm, tn), jnp.float32)]
    return pl.pallas_call(
        kernel,
        out_shape=jax.ShapeDtypeStruct((G, N, Dout), x2d.dtype),
        grid_spec=pltpu.PrefetchScalarGridSpec(
            num_scalar_prefetch=0,
            grid=grid,
            in_specs=[
                pl.BlockSpec((tm, tk), lambda i, j, k: (i, k)),
                pl.BlockSpec((G, tk, tn), lambda i, j, k: (0, k, j)),
                pl.BlockSpec((G, 1, tn), lambda i, j, k: (0, 0, j)),
            ],
            out_specs=pl.BlockSpec((G, tm, tn), lambda i, j, k: (0, i, j)),
            scratch_shapes=scratch,
        ),
        compiler_params=_MATMUL_COMPILER_PARAMS,
    )(x2d, w, b)


# ----------------------------------------------------------------------------
# Kernel 2: flash-style multi-head attention + fused W_concat epilogue
# ----------------------------------------------------------------------------
def _flash_mha_kernel(q_ref, k_ref, v_ref, wo_ref, bo_ref, o_ref,
                      m_ref, l_ref, acc_ref, *, num_heads, scale):
    """One (batch, q-tile) block; grid axis 2 runs over K/V tiles (online softmax)."""
    kv_i = pl.program_id(2)
    tq, D = q_ref.shape
    dk = D // num_heads

    @pl.when(kv_i == 0)
    def _init():
        m_ref[...] = jnp.full_like(m_ref, -jnp.inf)
        l_ref[...] = jnp.zeros_like(l_ref)
        acc_ref[...] = jnp.zeros_like(acc_ref)

    alphas, pvs = [], []
    for h in range(num_heads):                        # static unroll over heads
        lo = h * dk
        qh = q_ref[:, lo:lo + dk] * scale             # scale tq*dk elems, not the score matrix
        kh = k_ref[:, lo:lo + dk]
        vh = v_ref[:, lo:lo + dk]
        # QK^T without materialising a transpose: contract the last dims directly.
        s = jax.lax.dot_general(qh, kh, dimension_numbers=(((1,), (1,)), ((), ())),
                                preferred_element_type=jnp.float32)          # (tq, tkv)
        m_prev = m_ref[h]                                                    # (tq, 1)
        m_new = jnp.maximum(m_prev, jnp.max(s, axis=-1, keepdims=True))
        alpha = jnp.exp(m_prev - m_new)
        p = jnp.exp(s - m_new)
        l_ref[h] = alpha * l_ref[h] + jnp.sum(p, axis=-1, keepdims=True)
        m_ref[h] = m_new
        pvs.append(jnp.dot(p.astype(vh.dtype), vh,
                           preferred_element_type=jnp.float32))              # (tq, dk)
        alphas.append(jnp.broadcast_to(alpha, (tq, dk)))

    # Single lane-dense update of the (tq, D) f32 accumulator.
    acc_ref[...] = (jnp.concatenate(alphas, axis=-1) * acc_ref[...]
                    + jnp.concatenate(pvs, axis=-1))

    @pl.when(kv_i == pl.num_programs(2) - 1)
    def _finalize():
        # Exact EUP reciprocal (approx=False) -> no accuracy loss in the softmax denominator.
        inv = jnp.concatenate(
            [jnp.broadcast_to(pl.reciprocal(l_ref[h], approx=False), (tq, dk))
             for h in range(num_heads)], axis=-1)                            # (tq, D)
        attn = (acc_ref[...] * inv).astype(wo_ref.dtype)
        # Fused output projection (W_concat) epilogue: wo stays resident in VMEM, saving a
        # full HBM round trip of the attention output.
        out = jnp.dot(attn, wo_ref[...], preferred_element_type=jnp.float32)
        o_ref[...] = (out + bo_ref[...].astype(jnp.float32)).astype(o_ref.dtype)

    # TODO(synk): optional `mask` argument of the Attention submodule is not implemented
    #             (the module is exercised with mask=None).


def multi_head_attention(q_src, k_src, v_src, q_sel, k_sel, v_sel, wo, bo2d,
                         num_heads, *, tq=256, tkv=512):
    """softmax(QK^T/sqrt(dk)) V over all heads + fused W_concat projection.

    q_src / k_src / v_src are (G, B, S, D) stacks; `*_sel` picks the leading index so the fused
    (3, B, S, D) QKV projection (or the (2, ...) KV stack) is consumed directly from HBM
    without any host-side slicing / head-split transposes.
    """
    _, B, Sq, D = q_src.shape
    _, _, Sk, _ = k_src.shape
    dk = D // num_heads
    tq = _tile(Sq, tq, 16)
    tkv = _tile(Sk, tkv, 16)
    grid = (B, Sq // tq, Sk // tkv)
    kernel = functools.partial(_flash_mha_kernel, num_heads=num_heads,
                               scale=1.0 / math.sqrt(dk))
    return pl.pallas_call(
        kernel,
        out_shape=jax.ShapeDtypeStruct((B, Sq, D), q_src.dtype),
        grid_spec=pltpu.PrefetchScalarGridSpec(
            num_scalar_prefetch=0,
            grid=grid,
            in_specs=[
                pl.BlockSpec((None, None, tq, D),
                             lambda b, qi, ki, s=q_sel: (s, b, qi, 0)),
                pl.BlockSpec((None, None, tkv, D),
                             lambda b, qi, ki, s=k_sel: (s, b, ki, 0)),
                pl.BlockSpec((None, None, tkv, D),
                             lambda b, qi, ki, s=v_sel: (s, b, ki, 0)),
                pl.BlockSpec((D, D), lambda b, qi, ki: (0, 0)),   # wo: constant block, resident
                pl.BlockSpec((1, D), lambda b, qi, ki: (0, 0)),   # bo
            ],
            out_specs=pl.BlockSpec((None, tq, D), lambda b, qi, ki: (b, qi, 0)),
            scratch_shapes=[
                pltpu.VMEM((num_heads, tq, 1), jnp.float32),   # running max m per head
                pltpu.VMEM((num_heads, tq, 1), jnp.float32),   # running sum l per head
                pltpu.VMEM((tq, D), jnp.float32),              # lane-dense output accumulator
            ],
        ),
        compiler_params=pltpu.CompilerParams(
            dimension_semantics=("parallel", "parallel", "arbitrary"),
            vmem_limit_bytes=_VMEM_LIMIT,
        ),
    )(q_src, k_src, v_src, wo, bo2d)


# ----------------------------------------------------------------------------
# MultiHead forward (glue in plain JAX, hot paths in Pallas)
# ----------------------------------------------------------------------------
def multi_head_forward(params, Q, K, V, num_heads):
    # NOTE: path selection uses object identity; semantically-equal but distinct arrays simply
    # take the (equally correct) less-fused projection path.
    self_attn = (Q is K) and (K is V)
    kv_shared = K is V

    dtype = params["wo"].dtype
    B, Sq, D = Q.shape
    _, Sk, _ = K.shape
    Q = Q.astype(dtype)
    K = K.astype(dtype)
    V = V.astype(dtype)
    wo = params["wo"]
    bo = params["bo"].reshape(1, D)

    if self_attn:
        # Fused QKV projection: each input tile is read from HBM once for all three weights;
        # output is a (3, B, Sq, D) stack consumed directly by the attention kernel.
        qkv = linear_stacked(Q.reshape(B * Sq, D), params["w_qkv"], params["b_qkv"])
        qkv = qkv.reshape(3, B, Sq, D)
        return multi_head_attention(qkv, qkv, qkv, 0, 1, 2, wo, bo, num_heads)

    q = linear_stacked(Q.reshape(B * Sq, D), params["w_q1"], params["b_q1"]).reshape(1, B, Sq, D)
    if kv_shared:
        # Cross-attention with a shared K/V source: fuse the K and V projections (one pass
        # over the memory activations).
        kv = linear_stacked(K.reshape(B * Sk, D), params["w_kv"], params["b_kv"]).reshape(2, B, Sk, D)
        return multi_head_attention(q, kv, kv, 0, 0, 1, wo, bo, num_heads)

    k = linear_stacked(K.reshape(B * Sk, D), params["w_k1"], params["b_k1"]).reshape(1, B, Sk, D)
    v = linear_stacked(V.reshape(B * Sk, D), params["w_v1"], params["b_v1"]).reshape(1, B, Sk, D)
    return multi_head_attention(q, k, v, 0, 0, 0, wo, bo, num_heads)


# ----------------------------------------------------------------------------
# Pure-JAX reference (exact f32 math on the stored weights) for verification
# ----------------------------------------------------------------------------
def multi_head_reference(params, Q, K, V, num_heads):
    f32 = jnp.float32
    hp = jax.lax.Precision.HIGHEST
    B, Sq, D = Q.shape
    _, Sk, _ = K.shape
    dk = D // num_heads
    wq, wk, wv, wo = (params[n].astype(f32) for n in ("wq", "wk", "wv", "wo"))
    bq, bk, bv, bo = (params[n].astype(f32) for n in ("bq", "bk", "bv", "bo"))
    q = jnp.matmul(Q.astype(f32), wq, precision=hp) + bq
    k = jnp.matmul(K.astype(f32), wk, precision=hp) + bk
    v = jnp.matmul(V.astype(f32), wv, precision=hp) + bv
    q = q.reshape(B, Sq, num_heads, dk).transpose(0, 2, 1, 3)
    k = k.reshape(B, Sk, num_heads, dk).transpose(0, 2, 1, 3)
    v = v.reshape(B, Sk, num_heads, dk).transpose(0, 2, 1, 3)
    s = jnp.einsum("bhqd,bhkd->bhqk", q, k, precision=hp) / jnp.sqrt(f32(dk))
    p = jax.nn.softmax(s, axis=-1)
    o = jnp.einsum("bhqk,bhkd->bhqd", p, v, precision=hp)
    o = o.transpose(0, 2, 1, 3).reshape(B, Sq, D)
    return jnp.matmul(o, wo, precision=hp) + bo


def init_params(key, dim_model, dtype=jnp.float32):
    ks = jax.random.split(key, 8)
    bound = 1.0 / np.sqrt(dim_model)

    def u(k, shape):
        return jax.random.uniform(k, shape, jnp.float32, -bound, bound).astype(dtype)

    p = {
        "wq": u(ks[0], (dim_model, dim_model)), "bq": u(ks[1], (dim_model,)),
        "wk": u(ks[2], (dim_model, dim_model)), "bk": u(ks[3], (dim_model,)),
        "wv": u(ks[4], (dim_model, dim_model)), "bv": u(ks[5], (dim_model,)),
        "wo": u(ks[6], (dim_model, dim_model)), "bo": u(ks[7], (dim_model,)),
    }
    # Stacked weights for the fused projection kernels (built once at init, not per forward).
    p["w_qkv"] = jnp.stack([p["wq"], p["wk"], p["wv"]], axis=0)                # (3, D, D)
    p["b_qkv"] = jnp.stack([p["bq"], p["bk"], p["bv"]], axis=0)[:, None, :]    # (3, 1, D)
    p["w_kv"] = jnp.stack([p["wk"], p["wv"]], axis=0)                          # (2, D, D)
    p["b_kv"] = jnp.stack([p["bk"], p["bv"]], axis=0)[:, None, :]              # (2, 1, D)
    p["w_q1"], p["b_q1"] = p["wq"][None], p["bq"][None, None, :]
    p["w_k1"], p["b_k1"] = p["wk"][None], p["bk"][None, None, :]
    p["w_v1"], p["b_v1"] = p["wv"][None], p["bv"][None, None, :]
    return p


if __name__ == "__main__":
    num_heads = 4
    dim_model = 32
    batch = 2
    seq = 8
    assert dim_model % num_heads == 0

    key = jax.random.PRNGKey(0)
    kp, kx, kkv, kv2 = jax.random.split(key, 4)
    X = jax.random.normal(kx, (batch, seq, dim_model), dtype=jnp.float32)
    KV = jax.random.normal(kkv, (batch, 2 * seq, dim_model), dtype=jnp.float32)
    V2 = jax.random.normal(kv2, (batch, 2 * seq, dim_model), dtype=jnp.float32)

    # ---- float32 data path (no approximations in-kernel; residual delta vs. the HIGHEST-
    #      precision XLA reference is MXU pass-count / accumulation order only) ----
    params = init_params(kp, dim_model, jnp.float32)

    out_self = jax.block_until_ready(multi_head_forward(params, X, X, X, num_heads))
    ref_self = multi_head_reference(params, X, X, X, num_heads)
    np.testing.assert_allclose(np.asarray(out_self), np.asarray(ref_self),
                               rtol=5e-3, atol=5e-3)

    out_cross = jax.block_until_ready(multi_head_forward(params, X, KV, KV, num_heads))
    ref_cross = multi_head_reference(params, X, KV, KV, num_heads)
    np.testing.assert_allclose(np.asarray(out_cross), np.asarray(ref_cross),
                               rtol=5e-3, atol=5e-3)

    out_kv = jax.block_until_ready(multi_head_forward(params, X, KV, V2, num_heads))
    ref_kv = multi_head_reference(params, X, KV, V2, num_heads)
    np.testing.assert_allclose(np.asarray(out_kv), np.asarray(ref_kv),
                               rtol=5e-3, atol=5e-3)

    # ---- bfloat16 data path (MXU-native on v6e/v7x); kernel keeps f32 accumulation and an
    #      f32 softmax, reference does exact f32 math on the bf16-rounded weights ----
    params_bf16 = init_params(kp, dim_model, jnp.bfloat16)
    out_bf16 = jax.block_until_ready(multi_head_forward(params_bf16, X, X, X, num_heads))
    ref_bf16 = multi_head_reference(params_bf16, X, X, X, num_heads)
    np.testing.assert_allclose(np.asarray(out_bf16.astype(jnp.float32)),
                               np.asarray(ref_bf16), rtol=2e-2, atol=2e-2)

    print("KERNEL_OK")
</pallas_src>

<mosaic_0001>
module attributes {stable_mosaic.version = 11 : i64} {
  func.func @_stacked_linear_kernel(%arg0: i32, %arg1: i32, %arg2: i32, %arg3: memref<16x32xf32, #tpu.memory_space<vmem>>, %arg4: memref<3x32x32xf32, #tpu.memory_space<vmem>>, %arg5: memref<3x1x32xf32, #tpu.memory_space<vmem>>, %arg6: memref<3x16x32xf32, #tpu.memory_space<vmem>>) attributes {dimension_semantics = [#tpu.dimension_semantics<parallel>, #tpu.dimension_semantics<parallel>, #tpu.dimension_semantics<arbitrary>], iteration_bounds = array<i64: 1, 1, 1>, scalar_prefetch = 0 : i64, scratch_operands = 0 : i64, tpu.core_type = #tpu.core_type<tc>, window_params = [{transform_indices = @transform_0, window_bounds = array<i64: 16, 32>}, {transform_indices = @transform_1, window_bounds = array<i64: 3, 32, 32>}, {transform_indices = @transform_2, window_bounds = array<i64: 3, 1, 32>}, {transform_indices = @transform_3, window_bounds = array<i64: 3, 16, 32>}]} {
    %c0_i32 = arith.constant 0 : i32
    %0 = arith.cmpi eq, %arg2, %c0_i32 : i32
    %1 = arith.extui %0 : i1 to i32
    %c0_i32_0 = arith.constant 0 : i32
    %2 = arith.cmpi ne, %1, %c0_i32_0 : i32
    scf.if %2 {
      %c0_29 = arith.constant 0 : index
      %c0_30 = arith.constant 0 : index
      %c0_31 = arith.constant 0 : index
      %31 = vector.load %arg5[%c0_29, %c0_30, %c0_31] : memref<3x1x32xf32, #tpu.memory_space<vmem>>, vector<3x1x32xf32>
      %32 = vector.shape_cast %31 : vector<3x1x32xf32> to vector<3x1x32xf32>
      %33 = vector.broadcast %32 : vector<3x1x32xf32> to vector<3x16x32xf32>
      %c0_32 = arith.constant 0 : index
      %c0_33 = arith.constant 0 : index
      %c0_34 = arith.constant 0 : index
      %34 = vector.load %arg6[%c0_32, %c0_33, %c0_34] : memref<3x16x32xf32, #tpu.memory_space<vmem>>, vector<3x16x32xf32>
      tpu.vector_store %arg6[%c0_32, %c0_33, %c0_34], %33 {strides = array<i32>} : memref<3x16x32xf32, #tpu.memory_space<vmem>>, vector<3x16x32xf32>,
    } else {
    }
    %c0 = arith.constant 0 : index
    %c0_1 = arith.constant 0 : index
    %3 = vector.load %arg3[%c0, %c0_1] : memref<16x32xf32, #tpu.memory_space<vmem>>, vector<16x32xf32>
    %c0_2 = arith.constant 0 : index
    %c0_3 = arith.constant 0 : index
    %c0_4 = arith.constant 0 : index
    %4 = vector.load %arg6[%c0_2, %c0_3, %c0_4] : memref<3x16x32xf32, #tpu.memory_space<vmem>>, vector<1x16x32xf32>
    %5 = vector.shape_cast %4 : vector<1x16x32xf32> to vector<16x32xf32>
    %c0_5 = arith.constant 0 : index
    %c0_6 = arith.constant 0 : index
    %c0_7 = arith.constant 0 : index
    %6 = vector.load %arg4[%c0_5, %c0_6, %c0_7] : memref<3x32x32xf32, #tpu.memory_space<vmem>>, vector<1x32x32xf32>
    %7 = vector.shape_cast %6 : vector<1x32x32xf32> to vector<32x32xf32>
    %cst = arith.constant dense<0.000000e+00> : vector<16x32xf32>
    %8 = tpu.matmul %3, %7, %cst {dimension_numbers = #tpu.dot_dimension_numbers<[1], [0], [0], [1], [0, 0, 1, 1], [], []>} : vector<16x32xf32>, vector<32x32xf32>, vector<16x32xf32> -> vector<16x32xf32>
    %9 = arith.addf %5, %8 : vector<16x32xf32>
    %c0_8 = arith.constant 0 : index
    %c0_9 = arith.constant 0 : index
    %c0_10 = arith.constant 0 : index
    %10 = vector.load %arg6[%c0_8, %c0_9, %c0_10] : memref<3x16x32xf32, #tpu.memory_space<vmem>>, vector<1x16x32xf32>
    %11 = vector.shape_cast %10 : vector<1x16x32xf32> to vector<16x32xf32>
    %12 = vector.shape_cast %9 : vector<16x32xf32> to vector<1x16x32xf32>
    tpu.vector_store %arg6[%c0_8, %c0_9, %c0_10], %12 {strides = array<i32>} : memref<3x16x32xf32, #tpu.memory_space<vmem>>, vector<1x16x32xf32>,
    %c1 = arith.constant 1 : index
    %c0_11 = arith.constant 0 : index
    %c0_12 = arith.constant 0 : index
    %13 = vector.load %arg6[%c1, %c0_11, %c0_12] : memref<3x16x32xf32, #tpu.memory_space<vmem>>, vector<1x16x32xf32>
    %14 = vector.shape_cast %13 : vector<1x16x32xf32> to vector<16x32xf32>
    %c1_13 = arith.constant 1 : index
    %c0_14 = arith.constant 0 : index
    %c0_15 = arith.constant 0 : index
    %15 = vector.load %arg4[%c1_13, %c0_14, %c0_15] : memref<3x32x32xf32, #tpu.memory_space<vmem>>, vector<1x32x32xf32>
    %16 = vector.shape_cast %15 : vector<1x32x32xf32> to vector<32x32xf32>
    %cst_16 = arith.constant dense<0.000000e+00> : vector<16x32xf32>
    %17 = tpu.matmul %3, %16, %cst_16 {dimension_numbers = #tpu.dot_dimension_numbers<[1], [0], [0], [1], [0, 0, 1, 1], [], []>} : vector<16x32xf32>, vector<32x32xf32>, vector<16x32xf32> -> vector<16x32xf32>
    %18 = arith.addf %14, %17 : vector<16x32xf32>
    %c1_17 = arith.constant 1 : index
    %c0_18 = arith.constant 0 : index
    %c0_19 = arith.constant 0 : index
    %19 = vector.load %arg6[%c1_17, %c0_18, %c0_19] : memref<3x16x32xf32, #tpu.memory_space<vmem>>, vector<1x16x32xf32>
    %20 = vector.shape_cast %19 : vector<1x16x32xf32> to vector<16x32xf32>
    %21 = vector.shape_cast %18 : vector<16x32xf32> to vector<1x16x32xf32>
    tpu.vector_store %arg6[%c1_17, %c0_18, %c0_19], %21 {strides = array<i32>} : memref<3x16x32xf32, #tpu.memory_space<vmem>>, vector<1x16x32xf32>,
    %c2 = arith.constant 2 : index
    %c0_20 = arith.constant 0 : index
    %c0_21 = arith.constant 0 : index
    %22 = vector.load %arg6[%c2, %c0_20, %c0_21] : memref<3x16x32xf32, #tpu.memory_space<vmem>>, vector<1x16x32xf32>
    %23 = vector.shape_cast %22 : vector<1x16x32xf32> to vector<16x32xf32>
    %c2_22 = arith.constant 2 : index
    %c0_23 = arith.constant 0 : index
    %c0_24 = arith.constant 0 : index
    %24 = vector.load %arg4[%c2_22, %c0_23, %c0_24] : memref<3x32x32xf32, #tpu.memory_space<vmem>>, vector<1x32x32xf32>
    %25 = vector.shape_cast %24 : vector<1x32x32xf32> to vector<32x32xf32>
    %cst_25 = arith.constant dense<0.000000e+00> : vector<16x32xf32>
    %26 = tpu.matmul %3, %25, %cst_25 {dimension_numbers = #tpu.dot_dimension_numbers<[1], [0], [0], [1], [0, 0, 1, 1], [], []>} : vector<16x32xf32>, vector<32x32xf32>, vector<16x32xf32> -> vector<16x32xf32>
    %27 = arith.addf %23, %26 : vector<16x32xf32>
    %c2_26 = arith.constant 2 : index
    %c0_27 = arith.constant 0 : index
    %c0_28 = arith.constant 0 : index
    %28 = vector.load %arg6[%c2_26, %c0_27, %c0_28] : memref<3x16x32xf32, #tpu.memory_space<vmem>>, vector<1x16x32xf32>
    %29 = vector.shape_cast %28 : vector<1x16x32xf32> to vector<16x32xf32>
    %30 = vector.shape_cast %27 : vector<16x32xf32> to vector<1x16x32xf32>
    tpu.vector_store %arg6[%c2_26, %c0_27, %c0_28], %30 {strides = array<i32>} : memref<3x16x32xf32, #tpu.memory_space<vmem>>, vector<1x16x32xf32>,
    return
  }
  func.func @transform_0(%arg0: i32, %arg1: i32, %arg2: i32) -> (i32, i32) {
    %c0_i32 = arith.constant 0 : i32
    return %arg0, %arg2 : i32, i32
  }
  func.func @transform_1(%arg0: i32, %arg1: i32, %arg2: i32) -> (i32, i32, i32) {
    %c0_i32 = arith.constant 0 : i32
    %c0_i32_0 = arith.constant 0 : i32
    return %c0_i32, %arg2, %arg1 : i32, i32, i32
  }
  func.func @transform_2(%arg0: i32, %arg1: i32, %arg2: i32) -> (i32, i32, i32) {
    %c0_i32 = arith.constant 0 : i32
    %c0_i32_0 = arith.constant 0 : i32
    %c0_i32_1 = arith.constant 0 : i32
    return %c0_i32, %c0_i32_0, %arg1 : i32, i32, i32
  }
  func.func @transform_3(%arg0: i32, %arg1: i32, %arg2: i32) -> (i32, i32, i32) {
    %c0_i32 = arith.constant 0 : i32
    %c0_i32_0 = arith.constant 0 : i32
    return %c0_i32, %arg0, %arg1 : i32, i32, i32
  }
}

</mosaic_0001>

<llo_original>
// kernel: tpu_custom_call.1
$region0: #{tpu_custom_call.1}
  #allocation0 [shape = 'u32[]', space=smem, size = 0x4, offset = 0x4, fixed_abs, tag = 'smem constant byte address 0x4 - core index']
  #allocation1 [shape = 'u32[144,128]{1,0:T(1,128)}', space=vmem, size = 0x12000, scoped, tag = 'internal scratch']
  %s0 = inlined_call_operand.hbm [shape: f32[16,32], index: 0, kind: input, shape index: {}]
  %s1 = inlined_call_operand.hbm [shape: f32[3,32,32], index: 1, kind: input, shape index: {}]
  %s2 = inlined_call_operand.vmem [shape: f32[3,1,32], index: 2, kind: input, shape index: {}]
  %s3 = inlined_call_operand.hbm [shape: f32[3,16,32], index: 3, kind: output, shape index: {}]
  %s4 = sld [smem:[#allocation0]]
  $region34: #{tpu_custom_call.1} parent=0
    _
  %s6 = ssub.s32 1, %s4
  %s7 = scalar_select 0, %s6, %s4
  $region1: #{tpu_custom_call.1} parent=0
    #allocation2 [shape = 'u8[8192]{0}', space=vmem, size = 0x2000, scoped, tag = 'input window, operand 0, single buffered']
    #allocation3 [shape = 's32[1]{0}', space=sflag, size = 0x4, scoped, tag = 'scoped memory for tpu_custom_call.1']
    #allocation4 [shape = 's32[1]{0}', space=sflag, size = 0x4, scoped, tag = 'scoped memory for tpu_custom_call.1']
    #allocation5 [shape = 'u8[49152]{0}', space=vmem, size = 0xc000, scoped, tag = 'input window, operand 1, single buffered']
    #allocation6 [shape = 's32[1]{0}', space=sflag, size = 0x4, scoped, tag = 'scoped memory for tpu_custom_call.1']
    #allocation7 [shape = 'u8[24576]{0}', space=vmem, size = 0x6000, scoped, tag = 'output window, operand 0, single buffered']
    %8 = vsyncpa [#allocation3], 0
    %9 = vsyncpa [#allocation6], 0
    %10 = vsyncpa [#allocation4], 0
    // Predicated region
    $region2: #{tpu_custom_call.1} parent=1 // pred_check
      _
    $region3: #{tpu_custom_call.1} parent=1 // pred_check_branch
      %12 = sbr.rel (0) target = $region5
    $region4: #{tpu_custom_call.1} parent=1 // pred_region
      %s14 = ssub.s32 256, 256
      %15 = vsyncadd [#allocation3], %s14
      %s16 = sshll.u32 [#allocation2], 4
      %s17 = int_to_ptr.vmem [resolvable:$true] %s16
      %22 = dma.hbm_to_vmem [thread:$0]  %s0, 256, %s17, [#allocation3], 128, 128, 8
    $region5: #{tpu_custom_call.1} parent=1 // pred_fallthru
      _
    // Predicated region
    $region6: #{tpu_custom_call.1} parent=1 // pred_check
      _
    $region7: #{tpu_custom_call.1} parent=1 // pred_check_branch
      %24 = sbr.rel (0) target = $region9
    $region8: #{tpu_custom_call.1} parent=1 // pred_region
      %s26 = ssub.s32 1536, 1536
      %27 = vsyncadd [#allocation6], %s26
      %s28 = sshll.u32 [#allocation5], 4
      %s29 = int_to_ptr.vmem [resolvable:$true] %s28
      %34 = dma.hbm_to_vmem [thread:$0]  %s1, 1536, %s29, [#allocation6], 128, 128, 8
    $region9: #{tpu_custom_call.1} parent=1 // pred_fallthru
      _
    // Predicated region
    $region10: #{tpu_custom_call.1} parent=1 // pred_check
      _
    $region11: #{tpu_custom_call.1} parent=1 // pred_check_branch
      %36 = sbr.rel (0) target = $region13
    $region12: #{tpu_custom_call.1} parent=1 // pred_region
      _
    $region13: #{tpu_custom_call.1} parent=1 // pred_fallthru
      _
    // Predicated region
    $region14: #{tpu_custom_call.1} parent=1 // pred_check
      _
    $region15: #{tpu_custom_call.1} parent=1 // pred_check_branch
      %38 = sbr.rel (0) target = $region17
    $region16: #{tpu_custom_call.1} parent=1 // pred_region
      %39 = dma.done [#allocation3], 256
    $region17: #{tpu_custom_call.1} parent=1 // pred_fallthru
      _
    // Predicated region
    $region18: #{tpu_custom_call.1} parent=1 // pred_check
      _
    $region19: #{tpu_custom_call.1} parent=1 // pred_check_branch
      %41 = sbr.rel (0) target = $region21
    $region20: #{tpu_custom_call.1} parent=1 // pred_region
      %42 = dma.done [#allocation6], 1536
    $region21: #{tpu_custom_call.1} parent=1 // pred_fallthru
      _
    %p43 = scmp.eq.s32.totalorder 0, 0
    // Predicated region
    $region22: #{tpu_custom_call.1} parent=1 // pred_check
      %p44 = pneg %p43
    $region23: #{tpu_custom_call.1} parent=1 // pred_check_branch
      %46 = sbr.rel (%p44) target = $region25
    $region24: #{tpu_custom_call.1} parent=1 // pred_region
      %v47 = vld [vmem:[%s2] sm:$0x1]
      %v48 = vld [vmem:[%s2 + $0x1] sm:$0x1]
      %v49 = vld [vmem:[%s2 + $0x2] sm:$0x1]
      %v53 = vlaneseq
      %v54 = vshrl.u32 %v53, 7
      %v55 = vsub.s32 0, %v54
      %v56 = vrot.slane %v47, %v55
      %v57 = vlaneseq
      %v58 = vshrl.u32 %v57, 7
      %v59 = vsub.s32 0, %v58
      %v60 = vrot.slane %v48, %v59
      %v61 = vlaneseq
      %v62 = vshrl.u32 %v61, 7
      %v63 = vsub.s32 0, %v62
      %v64 = vrot.slane %v49, %v63
      %vm68 = vcmask 261120
      %69 = vst.msk [vmem:[#allocation7] sm:$0xff] %vm68, %v56
      %70 = vst.msk [vmem:[#allocation7 + $0x8] sm:$0xff] %vm68, %v56
      %71 = vst.msk [vmem:[#allocation7 + $0x10] sm:$0xff] %vm68, %v60
      %72 = vst.msk [vmem:[#allocation7 + $0x18] sm:$0xff] %vm68, %v60
      %73 = vst.msk [vmem:[#allocation7 + $0x20] sm:$0xff] %vm68, %v64
      %74 = vst.msk [vmem:[#allocation7 + $0x28] sm:$0xff] %vm68, %v64
    $region25: #{tpu_custom_call.1} parent=1 // pred_fallthru
      _
    %v75 = vld [vmem:[#allocation2] sm:$0xff]
    %v76 = vld [vmem:[#allocation2 + $0x8] sm:$0xff]
    %v77 = vld [vmem:[#allocation7] sm:$0xff]
    %v78 = vld [vmem:[#allocation7 + $0x8] sm:$0xff]
    %v79 = vld [vmem:[#allocation5] sm:$0xff]
    %v80 = vld [vmem:[#allocation5 + $0x8] sm:$0xff]
    %v81 = vld [vmem:[#allocation5 + $0x10] sm:$0xff]
    %v82 = vld [vmem:[#allocation5 + $0x18] sm:$0xff]
    %vm83 = vcmask 261120
    %v85 = vsel %vm83, %v75, 0
    %v88 = vsel %vm83, %v76, 0
    %90 = vmatprep.subr.mxu0 0.0
    %91 = vmatpush1.msra.mxu0 %v79
    %92 = vmatprep.subr.mxu0 0.0
    %93 = vmatpush1.msra.mxu0 %v80
    %94 = vmatprep.subr.mxu0 0.0
    %95 = vmatpush1.msra.mxu0 %v81
    %96 = vmatprep.subr.mxu0 0.0
    %97 = vmatpush1.msra.mxu0 %v82
    %98 = vmatprep.subr.mxu0 0.0
    %99 = vmatpush1.msra.mxu0 0.0
    %100 = vmatprep.subr.mxu0 0.0
    %101 = vmatpush1.msra.mxu0 0.0
    %102 = vmatprep.subr.mxu0 0.0
    %103 = vmatpush1.msra.mxu0 0.0
    %104 = vmatprep.subr.mxu0 0.0
    %105 = vmatpush1.msra.mxu0 0.0
    %106 = vmatprep.subr.mxu0 0.0
    %107 = vmatpush1.msra.mxu0 0.0
    %108 = vmatprep.subr.mxu0 0.0
    %109 = vmatpush1.msra.mxu0 0.0
    %110 = vmatprep.subr.mxu0 0.0
    %111 = vmatpush1.msra.mxu0 0.0
    %112 = vmatprep.subr.mxu0 0.0
    %113 = vmatpush1.msra.mxu0 0.0
    %114 = vmatprep.subr.mxu0 0.0
    %115 = vmatpush1.msra.mxu0 0.0
    %116 = vmatprep.subr.mxu0 0.0
    %117 = vmatpush1.msra.mxu0 0.0
    %118 = vmatprep.subr.mxu0 0.0
    %119 = vmatpush1.msra.mxu0 0.0
    %120 = vmatprep.subr.mxu0 0.0
    %121 = vmatpush1.msra.mxu0 0.0
    %122 = vmatprep.subr.mxu0 0.0
    %123 = vmatpush1.msra.mxu0 0.0
    %124 = vmatprep.subr.mxu0 0.0
    %125 = vmatpush1.msra.mxu0 0.0
    %126 = vmatprep.subr.mxu0 0.0
    %127 = vmatpush1.msra.mxu0 0.0
    %128 = vmatprep.subr.mxu0 0.0
    %129 = vmatpush1.msra.mxu0 0.0
    %130 = vmatprep.subr.mxu0 0.0
    %131 = vmatpush1.msra.mxu0 0.0
    %132 = vmatprep.subr.mxu0 0.0
    %133 = vmatpush1.msra.mxu0 0.0
    %134 = vmatprep.subr.mxu0 0.0
    %135 = vmatpush1.msra.mxu0 0.0
    %136 = vmatprep.subr.mxu0 0.0
    %137 = vmatpush1.msra.mxu0 0.0
    %138 = vmatprep.subr.mxu0 0.0
    %139 = vmatpush1.msra.mxu0 0.0
    %140 = vmatprep.subr.mxu0 0.0
    %141 = vmatpush1.msra.mxu0 0.0
    %142 = vmatprep.subr.mxu0 0.0
    %143 = vmatpush1.msra.mxu0 0.0
    %144 = vmatprep.subr.mxu0 0.0
    %145 = vmatpush1.msra.mxu0 0.0
    %146 = vmatprep.subr.mxu0 0.0
    %147 = vmatpush1.msra.mxu0 0.0
    %148 = vmatprep.subr.mxu0 0.0
    %149 = vmatpush1.msra.mxu0 0.0
    %150 = vmatprep.subr.mxu0 0.0
    %151 = vmatpush1.msra.mxu0 0.0
    %152 = vmatprep.subr.mxu0 0.0
    %153 = vmatpush1.msra.mxu0 0.0
    %154 = vmatprep.mubr.f32.mxu0 0.0
    %155 = vmatmul.mubr.f32.gmra.mrb[0].mxu0 %v85
    %v156 = vpop.f32.mrb[0].mxu0
    %v157 = vadd.f32 0.0, %v156
    %v158 = vpop.f32.mrb[0].mxu0
    %159 = vmatprep.mubr.f32.mxu0 0.0
    %160 = vmatmul.mubr.f32.gmra.mrb[0].mxu0 %v88
    %v161 = vpop.f32.mrb[0].mxu0
    %v162 = vadd.f32 0.0, %v161
    %v163 = vpop.f32.mrb[0].mxu0
    %164 = vdwg.mxu0
    %v165 = vadd.f32 %v77, %v157
    %v166 = vadd.f32 %v78, %v162
    %167 = vst.msk [vmem:[#allocation7] sm:$0xff] %vm83, %v165
    %168 = vst.msk [vmem:[#allocation7 + $0x8] sm:$0xff] %vm83, %v166
    %s169 = scalar_lea.vmem [#allocation7], 16
    %v170 = vld [vmem:[%s169] sm:$0xff]
    %v171 = vld [vmem:[%s169 + $0x8] sm:$0xff]
    %s172 = scalar_lea.vmem [#allocation5], 32
    %v173 = vld [vmem:[%s172] sm:$0xff]
    %v174 = vld [vmem:[%s172 + $0x8] sm:$0xff]
    %v175 = vld [vmem:[%s172 + $0x10] sm:$0xff]
    %v176 = vld [vmem:[%s172 + $0x18] sm:$0xff]
    %177 = vmatprep.subr.mxu0 0.0
    %178 = vmatpush1.msra.mxu0 %v173
    %179 = vmatprep.subr.mxu0 0.0
    %180 = vmatpush1.msra.mxu0 %v174
    %181 = vmatprep.subr.mxu0 0.0
    %182 = vmatpush1.msra.mxu0 %v175
    %183 = vmatprep.subr.mxu0 0.0
    %184 = vmatpush1.msra.mxu0 %v176
    %185 = vmatprep.subr.mxu0 0.0
    %186 = vmatpush1.msra.mxu0 0.0
    %187 = vmatprep.subr.mxu0 0.0
    %188 = vmatpush1.msra.mxu0 0.0
    %189 = vmatprep.subr.mxu0 0.0
    %190 = vmatpush1.msra.mxu0 0.0
    %191 = vmatprep.subr.mxu0 0.0
    %192 = vmatpush1.msra.mxu0 0.0
    %193 = vmatprep.subr.mxu0 0.0
    %194 = vmatpush1.msra.mxu0 0.0
    %195 = vmatprep.subr.mxu0 0.0
    %196 = vmatpush1.msra.mxu0 0.0
    %197 = vmatprep.subr.mxu0 0.0
    %198 = vmatpush1.msra.mxu0 0.0
    %199 = vmatprep.subr.mxu0 0.0
    %200 = vmatpush1.msra.mxu0 0.0
    %201 = vmatprep.subr.mxu0 0.0
    %202 = vmatpush1.msra.mxu0 0.0
    %203 = vmatprep.subr.mxu0 0.0
    %204 = vmatpush1.msra.mxu0 0.0
    %205 = vmatprep.subr.mxu0 0.0
    %206 = vmatpush1.msra.mxu0 0.0
    %207 = vmatprep.subr.mxu0 0.0
    %208 = vmatpush1.msra.mxu0 0.0
    %209 = vmatprep.subr.mxu0 0.0
    %210 = vmatpush1.msra.mxu0 0.0
    %211 = vmatprep.subr.mxu0 0.0
    %212 = vmatpush1.msra.mxu0 0.0
    %213 = vmatprep.subr.mxu0 0.0
    %214 = vmatpush1.msra.mxu0 0.0
    %215 = vmatprep.subr.mxu0 0.0
    %216 = vmatpush1.msra.mxu0 0.0
    %217 = vmatprep.subr.mxu0 0.0
    %218 = vmatpush1.msra.mxu0 0.0
    %219 = vmatprep.subr.mxu0 0.0
    %220 = vmatpush1.msra.mxu0 0.0
    %221 = vmatprep.subr.mxu0 0.0
    %222 = vmatpush1.msra.mxu0 0.0
    %223 = vmatprep.subr.mxu0 0.0
    %224 = vmatpush1.msra.mxu0 0.0
    %225 = vmatprep.subr.mxu0 0.0
    %226 = vmatpush1.msra.mxu0 0.0
    %227 = vmatprep.subr.mxu0 0.0
    %228 = vmatpush1.msra.mxu0 0.0
    %229 = vmatprep.subr.mxu0 0.0
    %230 = vmatpush1.msra.mxu0 0.0
    %231 = vmatprep.subr.mxu0 0.0
    %232 = vmatpush1.msra.mxu0 0.0
    %233 = vmatprep.subr.mxu0 0.0
    %234 = vmatpush1.msra.mxu0 0.0
    %235 = vmatprep.subr.mxu0 0.0
    %236 = vmatpush1.msra.mxu0 0.0
    %237 = vmatprep.subr.mxu0 0.0
    %238 = vmatpush1.msra.mxu0 0.0
    %239 = vmatprep.subr.mxu0 0.0
    %240 = vmatpush1.msra.mxu0 0.0
    %241 = vmatprep.mubr.f32.mxu0 0.0
    %242 = vmatmul.mubr.f32.gmra.mrb[0].mxu0 %v85
    %v243 = vpop.f32.mrb[0].mxu0
    %v244 = vadd.f32 0.0, %v243
    %v245 = vpop.f32.mrb[0].mxu0
    %246 = vmatprep.mubr.f32.mxu0 0.0
    %247 = vmatmul.mubr.f32.gmra.mrb[0].mxu0 %v88
    %v248 = vpop.f32.mrb[0].mxu0
    %v249 = vadd.f32 0.0, %v248
    %v250 = vpop.f32.mrb[0].mxu0
    %251 = vdwg.mxu0
    %v252 = vadd.f32 %v170, %v244
    %v253 = vadd.f32 %v171, %v249
    %254 = vst.msk [vmem:[%s169] sm:$0xff] %vm83, %v252
    %255 = vst.msk [vmem:[%s169 + $0x8] sm:$0xff] %vm83, %v253
    %s256 = scalar_lea.vmem [#allocation7], 32
    %v257 = vld [vmem:[%s256] sm:$0xff]
    %v258 = vld [vmem:[%s256 + $0x8] sm:$0xff]
    %s259 = scalar_lea.vmem [#allocation5], 64
    %v260 = vld [vmem:[%s259] sm:$0xff]
    %v261 = vld [vmem:[%s259 + $0x8] sm:$0xff]
    %v262 = vld [vmem:[%s259 + $0x10] sm:$0xff]
    %v263 = vld [vmem:[%s259 + $0x18] sm:$0xff]
    %264 = vmatprep.subr.mxu0 0.0
    %265 = vmatpush1.msra.mxu0 %v260
    %266 = vmatprep.subr.mxu0 0.0
    %267 = vmatpush1.msra.mxu0 %v261
    %268 = vmatprep.subr.mxu0 0.0
    %269 = vmatpush1.msra.mxu0 %v262
    %270 = vmatprep.subr.mxu0 0.0
    %271 = vmatpush1.msra.mxu0 %v263
    %272 = vmatprep.subr.mxu0 0.0
    %273 = vmatpush1.msra.mxu0 0.0
    %274 = vmatprep.subr.mxu0 0.0
    %275 = vmatpush1.msra.mxu0 0.0
    %276 = vmatprep.subr.mxu0 0.0
    %277 = vmatpush1.msra.mxu0 0.0
    %278 = vmatprep.subr.mxu0 0.0
    %279 = vmatpush1.msra.mxu0 0.0
    %280 = vmatprep.subr.mxu0 0.0
    %281 = vmatpush1.msra.mxu0 0.0
    %282 = vmatprep.subr.mxu0 0.0
    %283 = vmatpush1.msra.mxu0 0.0
    %284 = vmatprep.subr.mxu0 0.0
    %285 = vmatpush1.msra.mxu0 0.0
    %286 = vmatprep.subr.mxu0 0.0
    %287 = vmatpush1.msra.mxu0 0.0
    %288 = vmatprep.subr.mxu0 0.0
    %289 = vmatpush1.msra.mxu0 0.0
    %290 = vmatprep.subr.mxu0 0.0
    %291 = vmatpush1.msra.mxu0 0.0
    %292 = vmatprep.subr.mxu0 0.0
    %293 = vmatpush1.msra.mxu0 0.0
    %294 = vmatprep.subr.mxu0 0.0
    %295 = vmatpush1.msra.mxu0 0.0
    %296 = vmatprep.subr.mxu0 0.0
    %297 = vmatpush1.msra.mxu0 0.0
    %298 = vmatprep.subr.mxu0 0.0
    %299 = vmatpush1.msra.mxu0 0.0
    %300 = vmatprep.subr.mxu0 0.0
    %301 = vmatpush1.msra.mxu0 0.0
    %302 = vmatprep.subr.mxu0 0.0
    %303 = vmatpush1.msra.mxu0 0.0
    %304 = vmatprep.subr.mxu0 0.0
    %305 = vmatpush1.msra.mxu0 0.0
    %306 = vmatprep.subr.mxu0 0.0
    %307 = vmatpush1.msra.mxu0 0.0
    %308 = vmatprep.subr.mxu0 0.0
    %309 = vmatpush1.msra.mxu0 0.0
    %310 = vmatprep.subr.mxu0 0.0
    %311 = vmatpush1.msra.mxu0 0.0
    %312 = vmatprep.subr.mxu0 0.0
    %313 = vmatpush1.msra.mxu0 0.0
    %314 = vmatprep.subr.mxu0 0.0
    %315 = vmatpush1.msra.mxu0 0.0
    %316 = vmatprep.subr.mxu0 0.0
    %317 = vmatpush1.msra.mxu0 0.0
    %318 = vmatprep.subr.mxu0 0.0
    %319 = vmatpush1.msra.mxu0 0.0
    %320 = vmatprep.subr.mxu0 0.0
    %321 = vmatpush1.msra.mxu0 0.0
    %322 = vmatprep.subr.mxu0 0.0
    %323 = vmatpush1.msra.mxu0 0.0
    %324 = vmatprep.subr.mxu0 0.0
    %325 = vmatpush1.msra.mxu0 0.0
    %326 = vmatprep.subr.mxu0 0.0
    %327 = vmatpush1.msra.mxu0 0.0
    %328 = vmatprep.mubr.f32.mxu0 0.0
    %329 = vmatmul.mubr.f32.gmra.mrb[0].mxu0 %v85
    %v330 = vpop.f32.mrb[0].mxu0
    %v331 = vadd.f32 0.0, %v330
    %v332 = vpop.f32.mrb[0].mxu0
    %333 = vmatprep.mubr.f32.mxu0 0.0
    %334 = vmatmul.mubr.f32.gmra.mrb[0].mxu0 %v88
    %v335 = vpop.f32.mrb[0].mxu0
    %v336 = vadd.f32 0.0, %v335
    %v337 = vpop.f32.mrb[0].mxu0
    %338 = vdwg.mxu0
    %v339 = vadd.f32 %v257, %v331
    %v340 = vadd.f32 %v258, %v336
    %341 = vst.msk [vmem:[%s256] sm:$0xff] %vm83, %v339
    %342 = vst.msk [vmem:[%s256 + $0x8] sm:$0xff] %vm83, %v340
    // Predicated region
    $region26: #{tpu_custom_call.1} parent=1 // pred_check
      _
    $region27: #{tpu_custom_call.1} parent=1 // pred_check_branch
      %344 = sbr.rel (0) target = $region29
    $region28: #{tpu_custom_call.1} parent=1 // pred_region
      %s346 = ssub.s32 768, 768
      %347 = vsyncadd [#allocation4], %s346
      %s348 = sshll.u32 [#allocation7], 4
      %s349 = int_to_ptr.vmem [resolvable:$true] %s348
      %354 = dma.vmem_to_hbm [thread:$0]  %s349, 768, %s3, [#allocation4], 128, 128, 8
    $region29: #{tpu_custom_call.1} parent=1 // pred_fallthru
      _
    // Predicated region
    $region30: #{tpu_custom_call.1} parent=1 // pred_check
      _
    $region31: #{tpu_custom_call.1} parent=1 // pred_check_branch
      %356 = sbr.rel (0) target = $region33
    $region32: #{tpu_custom_call.1} parent=1 // pred_region
      %357 = dma.done [#allocation4], 768
    $region33: #{tpu_custom_call.1} parent=1 // pred_fallthru
      _
    %358 = vsyncpa [#allocation3], 1
    %359 = vsyncpa [#allocation6], 1
    %360 = vsyncpa [#allocation4], 1

</llo_original>
